<compile_context>
chip_gen: v7x
topology: tpu7x:2x2x1
jax: 0.10.0
libtpu: 0.0.40
codegen_flags: <defaults>
</compile_context>

<pallas_src>
import jax
import jax.numpy as jnp
from jax.experimental import pallas as pl
from jax.experimental.pallas import tpu as pltpu

_MiB = 1024 * 1024


# --------------------------------------------------------------------------
# Kernels
# --------------------------------------------------------------------------
def _mlp_kernel(x_ref, w1_ref, b1_ref, w2_ref, b2_ref, out_ref):
    """Fused path: full (padded) W1/W2 resident in VMEM."""
    x = x_ref[...]                                              # (TB, D_in)
    h = jnp.dot(x, w1_ref[...], preferred_element_type=jnp.float32)
    h = jnp.maximum(h + b1_ref[...].astype(jnp.float32), 0.0)   # (TB, D_h)
    o = jnp.dot(h.astype(w2_ref.dtype), w2_ref[...],
                preferred_element_type=jnp.float32)
    out_ref[...] = (o + b2_ref[...].astype(jnp.float32)).astype(out_ref.dtype)


def _mlp_kernel_dh_tiled(x_ref, w1_ref, b1_ref, w2_ref, b2_ref, out_ref, acc_ref):
    """d_h-tiled fallback: accumulate the second matmul over the hidden axis."""
    k = pl.program_id(1)

    @pl.when(k == 0)
    def _():
        acc_ref[...] = jnp.zeros_like(acc_ref)

    h = jnp.dot(x_ref[...], w1_ref[...], preferred_element_type=jnp.float32)
    h = jnp.maximum(h + b1_ref[...].astype(jnp.float32), 0.0)
    acc_ref[...] += jnp.dot(h.astype(w2_ref.dtype), w2_ref[...],
                            preferred_element_type=jnp.float32)

    @pl.when(k == pl.num_programs(1) - 1)
    def _():
        out_ref[...] = (acc_ref[...]
                        + b2_ref[...].astype(jnp.float32)).astype(out_ref.dtype)


# --------------------------------------------------------------------------
# Helpers
# --------------------------------------------------------------------------
def _round_up(n, m):
    return ((n + m - 1) // m) * m


def _sublane_align(dtype):
    # Min row tile: 8 rows for 4-byte, 16 for 2-byte, 32 for 1-byte dtypes.
    itemsize = jnp.dtype(dtype).itemsize
    return max(8, 32 // max(itemsize, 1))


def _device_kind():
    try:
        return jax.devices()[0].device_kind.lower()
    except Exception:  # pragma: no cover - CPU fallback / interpret mode
        return ""


def _is_v7x(kind):
    return "v7" in kind


def _resident_spec(shape, index_map):
    """Single-buffered BlockSpec for grid-invariant operands."""
    try:
        return pl.BlockSpec(shape, index_map, pipeline_mode=pl.Buffered(1))
    except TypeError:  # older jax without pipeline_mode: fall back to default
        return pl.BlockSpec(shape, index_map)


# --------------------------------------------------------------------------
# Wrapper
# --------------------------------------------------------------------------
def simple_predictor_forward(x, w1, b1, w2, b2, *, block_b=512,
                             max_resident_weight_bytes=None,
                             compute_dtype=None):
    """Fused MLP forward: ReLU(x @ W1 + b1) @ W2 + b2.

    x: (..., D_in); w1: (D_in, D_h); b1: (D_h,); w2: (D_h, D_out); b2: (D_out,)
    Returns (..., D_out) in x's original dtype.
    """
    out_dtype = x.dtype
    if compute_dtype is not None:  # opt-in low-precision matmul (f32 accumulate)
        x, w1, b1, w2, b2 = (a.astype(compute_dtype) for a in (x, w1, b1, w2, b2))

    orig_shape = x.shape
    d_in = orig_shape[-1]
    d_h = w1.shape[1]
    d_out = w2.shape[1]

    kind = _device_kind()
    vmem_phys = 64 * _MiB if _is_v7x(kind) else 128 * _MiB
    vmem_cap = 48 * _MiB if _is_v7x(kind) else 100 * _MiB
    if max_resident_weight_bytes is None:
        max_resident_weight_bytes = vmem_phys // 3

    x2 = x.reshape(-1, d_in)
    batch = x2.shape[0]
    itemsize = jnp.dtype(x2.dtype).itemsize
    wbytes = jnp.dtype(w1.dtype).itemsize

    # --- Batch: pad only to sublane alignment, not to a full tile multiple.
    align = _sublane_align(x2.dtype)
    b_aligned = _round_up(batch, align)
    if b_aligned != batch:
        x2 = jnp.pad(x2, ((0, b_aligned - batch), (0, 0)))

    # --- Lane-dense hidden / output widths, and d_h-tiling decision.
    d_out_p = _round_up(d_out, 128)
    n_k = 1
    while True:
        d_h_p = _round_up(d_h, 128 * n_k)
        th = d_h_p // n_k
        per_step_w = (d_in * th + th * d_out_p) * wbytes
        if per_step_w <= max_resident_weight_bytes or th <= 128:
            break
        n_k += 1

    # --- Pad weights/biases (zero hidden cols are inert through ReLU/matmul2).
    w1p, w2p = w1, w2
    b1p = b1.reshape(1, d_h)
    b2p = b2.reshape(1, d_out)
    if d_h_p != d_h:
        w1p = jnp.pad(w1p, ((0, 0), (0, d_h_p - d_h)))
        b1p = jnp.pad(b1p, ((0, 0), (0, d_h_p - d_h)))
        w2p = jnp.pad(w2p, ((0, d_h_p - d_h), (0, 0)))
    if d_out_p != d_out:
        w2p = jnp.pad(w2p, ((0, 0), (0, d_out_p - d_out)))
        b2p = jnp.pad(b2p, ((0, 0), (0, d_out_p - d_out)))

    # --- Batch tile: large by default, shrunk to fit the VMEM budget.
    def _vmem_needed(tb_):
        return (2 * tb_ * (d_in + d_out_p) * itemsize          # dbl-buffered x/out
                + (d_in * th + th * d_out_p) * wbytes          # resident weights
                + (d_h_p + d_out_p) * wbytes                   # biases
                + tb_ * th * (4 + wbytes)                      # f32 hidden + cast copy
                + tb_ * d_out_p * 4)                           # f32 result/accumulator

    tb = min(_round_up(block_b, align), b_aligned)
    while _vmem_needed(tb) > vmem_cap - 4 * _MiB and tb > align:
        tb = max(align, _round_up(tb // 2, align))
    # v7x: 2 TensorCores share the chip — give the parallel batch axis >=2 steps.
    if _is_v7x(kind) and pl.cdiv(b_aligned, tb) < 2 and b_aligned >= 2 * align:
        tb = _round_up(pl.cdiv(b_aligned, 2), align)
    n_b = pl.cdiv(b_aligned, tb)

    vmem_limit = int(min(vmem_cap, max(32 * _MiB, _vmem_needed(tb) + 4 * _MiB)))
    cost = pl.CostEstimate(
        flops=int(2 * b_aligned * (d_in * d_h_p + d_h_p * d_out_p)),
        transcendentals=0,
        bytes_accessed=int(x2.size * itemsize + (w1p.size + w2p.size) * wbytes
                           + b_aligned * d_out_p * itemsize),
    )

    out_shape = jax.ShapeDtypeStruct((b_aligned, d_out_p), out_dtype)

    if n_k == 1:
        # Fused path: weights fully VMEM-resident, grid over batch only.
        out = pl.pallas_call(
            _mlp_kernel,
            out_shape=out_shape,
            grid_spec=pltpu.PrefetchScalarGridSpec(
                num_scalar_prefetch=0,
                grid=(n_b,),
                in_specs=[
                    pl.BlockSpec((tb, d_in), lambda i: (i, 0)),            # x tile
                    _resident_spec((d_in, d_h_p), lambda i: (0, 0)),       # W1
                    _resident_spec((1, d_h_p), lambda i: (0, 0)),          # b1
                    _resident_spec((d_h_p, d_out_p), lambda i: (0, 0)),    # W2
                    _resident_spec((1, d_out_p), lambda i: (0, 0)),        # b2
                ],
                out_specs=pl.BlockSpec((tb, d_out_p), lambda i: (i, 0)),
            ),
            compiler_params=pltpu.CompilerParams(
                dimension_semantics=("parallel",),
                vmem_limit_bytes=vmem_limit),
            cost_estimate=cost,
        )(x2, w1p, b1p, w2p, b2p)
    else:
        # Large-weight fallback (v7x 64 MiB VMEM): tile d_h, accumulate in f32.
        out = pl.pallas_call(
            _mlp_kernel_dh_tiled,
            out_shape=out_shape,
            grid_spec=pltpu.PrefetchScalarGridSpec(
                num_scalar_prefetch=0,
                grid=(n_b, n_k),
                in_specs=[
                    pl.BlockSpec((tb, d_in), lambda i, k: (i, 0)),         # x tile
                    pl.BlockSpec((d_in, th), lambda i, k: (0, k)),         # W1 col tile
                    pl.BlockSpec((1, th), lambda i, k: (0, k)),            # b1 tile
                    pl.BlockSpec((th, d_out_p), lambda i, k: (k, 0)),      # W2 row tile
                    _resident_spec((1, d_out_p), lambda i, k: (0, 0)),     # b2
                ],
                out_specs=pl.BlockSpec((tb, d_out_p), lambda i, k: (i, 0)),
                scratch_shapes=[pltpu.VMEM((tb, d_out_p), jnp.float32)],
            ),
            compiler_params=pltpu.CompilerParams(
                dimension_semantics=("parallel", "arbitrary"),
                vmem_limit_bytes=vmem_limit),
            cost_estimate=cost,
        )(x2, w1p, b1p, w2p, b2p)

    out = out[:batch, :d_out]
    return out.reshape(*orig_shape[:-1], d_out)


def _reference(x, w1, b1, w2, b2):
    h = jnp.maximum(x @ w1 + b1, 0.0)
    return h @ w2 + b2


if __name__ == "__main__":
    key = jax.random.PRNGKey(0)
    k_x, k_w1, k_b1, k_w2, k_b2 = jax.random.split(key, 5)

    batch, input_dim, hidden_dim, output_dim = 16, 32, 64, 16

    x = jax.random.normal(k_x, (batch, input_dim), dtype=jnp.float32)
    w1 = jax.random.normal(k_w1, (input_dim, hidden_dim), dtype=jnp.float32) * 0.1
    b1 = jax.random.normal(k_b1, (hidden_dim,), dtype=jnp.float32) * 0.1
    w2 = jax.random.normal(k_w2, (hidden_dim, output_dim), dtype=jnp.float32) * 0.1
    b2 = jax.random.normal(k_b2, (output_dim,), dtype=jnp.float32) * 0.1

    # Path A: weights fully VMEM-resident (default).
    ref = _reference(x, w1, b1, w2, b2)
    out = jax.block_until_ready(simple_predictor_forward(x, w1, b1, w2, b2))
    assert out.shape == (batch, output_dim), out.shape
    assert jnp.allclose(out, ref, rtol=2e-2, atol=2e-2), (
        float(jnp.max(jnp.abs(out - ref))),)

    # Path B: force the d_h-tiled accumulator fallback (the v7x large-weight
    # path) at a small shape, using a hidden dim big enough to split (256->2x128).
    hidden2 = 256
    kw1b, kb1b, kw2b, kb2b = jax.random.split(jax.random.PRNGKey(1), 4)
    w1b = jax.random.normal(kw1b, (input_dim, hidden2), dtype=jnp.float32) * 0.1
    b1b = jax.random.normal(kb1b, (hidden2,), dtype=jnp.float32) * 0.1
    w2b = jax.random.normal(kw2b, (hidden2, output_dim), dtype=jnp.float32) * 0.1
    b2b = jax.random.normal(kb2b, (output_dim,), dtype=jnp.float32) * 0.1
    ref_b = _reference(x, w1b, b1b, w2b, b2b)
    out_b = jax.block_until_ready(
        simple_predictor_forward(x, w1b, b1b, w2b, b2b,
                                 max_resident_weight_bytes=1))
    assert out_b.shape == (batch, output_dim), out_b.shape
    assert jnp.allclose(out_b, ref_b, rtol=2e-2, atol=2e-2), (
        float(jnp.max(jnp.abs(out_b - ref_b))),)

    print("KERNEL_OK")
</pallas_src>

<mosaic_0001>
module attributes {stable_mosaic.version = 11 : i64} {
  func.func @_mlp_kernel(%arg0: i32, %arg1: memref<16x32xf32, #tpu.memory_space<vmem>>, %arg2: memref<32x128xf32, #tpu.memory_space<vmem>>, %arg3: memref<1x128xf32, #tpu.memory_space<vmem>>, %arg4: memref<128x128xf32, #tpu.memory_space<vmem>>, %arg5: memref<1x128xf32, #tpu.memory_space<vmem>>, %arg6: memref<16x128xf32, #tpu.memory_space<vmem>>) attributes {dimension_semantics = [#tpu.dimension_semantics<parallel>], iteration_bounds = array<i64: 1>, scalar_prefetch = 0 : i64, scratch_operands = 0 : i64, tpu.core_type = #tpu.core_type<tc>, window_params = [{transform_indices = @transform_0, window_bounds = array<i64: 16, 32>}, {pipeline_mode = #tpu.pipeline_mode<synchronous>, transform_indices = @transform_1, window_bounds = array<i64: 32, 128>}, {pipeline_mode = #tpu.pipeline_mode<synchronous>, transform_indices = @transform_2, window_bounds = array<i64: 1, 128>}, {pipeline_mode = #tpu.pipeline_mode<synchronous>, transform_indices = @transform_3, window_bounds = array<i64: 128, 128>}, {pipeline_mode = #tpu.pipeline_mode<synchronous>, transform_indices = @transform_4, window_bounds = array<i64: 1, 128>}, {transform_indices = @transform_5, window_bounds = array<i64: 16, 128>}]} {
    %c0 = arith.constant 0 : index
    %c0_0 = arith.constant 0 : index
    %0 = vector.load %arg1[%c0, %c0_0] : memref<16x32xf32, #tpu.memory_space<vmem>>, vector<16x32xf32>
    %c0_1 = arith.constant 0 : index
    %c0_2 = arith.constant 0 : index
    %1 = vector.load %arg2[%c0_1, %c0_2] : memref<32x128xf32, #tpu.memory_space<vmem>>, vector<32x128xf32>
    %cst = arith.constant dense<0.000000e+00> : vector<16x128xf32>
    %2 = tpu.matmul %0, %1, %cst {dimension_numbers = #tpu.dot_dimension_numbers<[1], [0], [0], [1], [0, 0, 1, 1], [], []>} : vector<16x32xf32>, vector<32x128xf32>, vector<16x128xf32> -> vector<16x128xf32>
    %c0_3 = arith.constant 0 : index
    %c0_4 = arith.constant 0 : index
    %3 = vector.load %arg3[%c0_3, %c0_4] : memref<1x128xf32, #tpu.memory_space<vmem>>, vector<1x128xf32>
    %4 = vector.broadcast %3 : vector<1x128xf32> to vector<16x128xf32>
    %5 = arith.addf %2, %4 : vector<16x128xf32>
    %cst_5 = arith.constant 0.000000e+00 : f32
    %6 = vector.broadcast %cst_5 : f32 to vector<16x128xf32>
    %7 = arith.maximumf %5, %6 : vector<16x128xf32>
    %c0_6 = arith.constant 0 : index
    %c0_7 = arith.constant 0 : index
    %8 = vector.load %arg4[%c0_6, %c0_7] : memref<128x128xf32, #tpu.memory_space<vmem>>, vector<128x128xf32>
    %cst_8 = arith.constant dense<0.000000e+00> : vector<16x128xf32>
    %9 = tpu.matmul %7, %8, %cst_8 {dimension_numbers = #tpu.dot_dimension_numbers<[1], [0], [0], [1], [0, 0, 1, 1], [], []>} : vector<16x128xf32>, vector<128x128xf32>, vector<16x128xf32> -> vector<16x128xf32>
    %c0_9 = arith.constant 0 : index
    %c0_10 = arith.constant 0 : index
    %10 = vector.load %arg5[%c0_9, %c0_10] : memref<1x128xf32, #tpu.memory_space<vmem>>, vector<1x128xf32>
    %11 = vector.broadcast %10 : vector<1x128xf32> to vector<16x128xf32>
    %12 = arith.addf %9, %11 : vector<16x128xf32>
    %c0_11 = arith.constant 0 : index
    %c0_12 = arith.constant 0 : index
    %13 = vector.load %arg6[%c0_11, %c0_12] : memref<16x128xf32, #tpu.memory_space<vmem>>, vector<16x128xf32>
    tpu.vector_store %arg6[%c0_11, %c0_12], %12 {strides = array<i32>} : memref<16x128xf32, #tpu.memory_space<vmem>>, vector<16x128xf32>,
    return
  }
  func.func @transform_0(%arg0: i32) -> (i32, i32) {
    %c0_i32 = arith.constant 0 : i32
    %c0_i32_0 = arith.constant 0 : i32
    return %arg0, %c0_i32 : i32, i32
  }
  func.func @transform_1(%arg0: i32) -> (i32, i32) {
    %c0_i32 = arith.constant 0 : i32
    %c0_i32_0 = arith.constant 0 : i32
    %c0_i32_1 = arith.constant 0 : i32
    return %c0_i32, %c0_i32_0 : i32, i32
  }
  func.func @transform_2(%arg0: i32) -> (i32, i32) {
    %c0_i32 = arith.constant 0 : i32
    %c0_i32_0 = arith.constant 0 : i32
    %c0_i32_1 = arith.constant 0 : i32
    return %c0_i32, %c0_i32_0 : i32, i32
  }
  func.func @transform_3(%arg0: i32) -> (i32, i32) {
    %c0_i32 = arith.constant 0 : i32
    %c0_i32_0 = arith.constant 0 : i32
    %c0_i32_1 = arith.constant 0 : i32
    return %c0_i32, %c0_i32_0 : i32, i32
  }
  func.func @transform_4(%arg0: i32) -> (i32, i32) {
    %c0_i32 = arith.constant 0 : i32
    %c0_i32_0 = arith.constant 0 : i32
    %c0_i32_1 = arith.constant 0 : i32
    return %c0_i32, %c0_i32_0 : i32, i32
  }
  func.func @transform_5(%arg0: i32) -> (i32, i32) {
    %c0_i32 = arith.constant 0 : i32
    %c0_i32_0 = arith.constant 0 : i32
    return %arg0, %c0_i32 : i32, i32
  }
}

</mosaic_0001>

<llo_original>
// kernel: tpu_custom_call.1
$region0: #{tpu_custom_call.1}
  #allocation0 [shape = 'u32[]', space=smem, size = 0x4, offset = 0x4, fixed_abs, tag = 'smem constant byte address 0x4 - core index']
  #allocation1 [shape = 'u32[144,128]{1,0:T(1,128)}', space=vmem, size = 0x12000, scoped, tag = 'internal scratch']
  %s0 = inlined_call_operand.hbm [shape: f32[16,32], index: 0, kind: input, shape index: {}]
  %s1 = inlined_call_operand.hbm [shape: f32[32,128], index: 1, kind: input, shape index: {}]
  %s2 = inlined_call_operand.vmem [shape: f32[1,128], index: 2, kind: input, shape index: {}]
  %s3 = inlined_call_operand.hbm [shape: f32[128,128], index: 3, kind: input, shape index: {}]
  %s4 = inlined_call_operand.vmem [shape: f32[1,128], index: 4, kind: input, shape index: {}]
  %s5 = inlined_call_operand.hbm [shape: f32[16,128], index: 5, kind: output, shape index: {}]
  %s6 = sld [smem:[#allocation0]]
  $region42: #{tpu_custom_call.1} parent=0
    _
  %s8 = ssub.s32 1, %s6
  %s9 = scalar_select 0, %s8, %s6
  $region1: #{tpu_custom_call.1} parent=0
    #allocation2 [shape = 'u8[8192]{0}', space=vmem, size = 0x2000, scoped, tag = 'input window, operand 0, single buffered']
    #allocation3 [shape = 's32[1]{0}', space=sflag, size = 0x4, scoped, tag = 'scoped memory for tpu_custom_call.1']
    #allocation4 [shape = 's32[1]{0}', space=sflag, size = 0x4, scoped, tag = 'scoped memory for tpu_custom_call.1']
    #allocation5 [shape = 'u8[16384]{0}', space=vmem, size = 0x4000, scoped, tag = 'input window, operand 1, single buffered']
    #allocation6 [shape = 's32[1]{0}', space=sflag, size = 0x4, scoped, tag = 'scoped memory for tpu_custom_call.1']
    #allocation7 [shape = 'u8[65536]{0}', space=vmem, size = 0x10000, scoped, tag = 'input window, operand 3, single buffered']
    #allocation8 [shape = 'u8[8192]{0}', space=vmem, size = 0x2000, scoped, tag = 'output window, operand 0, single buffered']
    %10 = vsyncpa [#allocation3], 0
    %11 = vsyncpa [#allocation6], 0
    %12 = vsyncpa [#allocation4], 0
    // Predicated region
    $region2: #{tpu_custom_call.1} parent=1 // pred_check
      _
    $region3: #{tpu_custom_call.1} parent=1 // pred_check_branch
      %14 = sbr.rel (0) target = $region5
    $region4: #{tpu_custom_call.1} parent=1 // pred_region
      %s16 = ssub.s32 256, 256
      %17 = vsyncadd [#allocation3], %s16
      %s18 = sshll.u32 [#allocation2], 4
      %s19 = int_to_ptr.vmem [resolvable:$true] %s18
      %24 = dma.hbm_to_vmem [thread:$0]  %s0, 256, %s19, [#allocation3], 128, 128, 8
    $region5: #{tpu_custom_call.1} parent=1 // pred_fallthru
      _
    // Predicated region
    $region6: #{tpu_custom_call.1} parent=1 // pred_check
      _
    $region7: #{tpu_custom_call.1} parent=1 // pred_check_branch
      %26 = sbr.rel (0) target = $region9
    $region8: #{tpu_custom_call.1} parent=1 // pred_region
      %s28 = ssub.s32 512, 512
      %29 = vsyncadd [#allocation6], %s28
      %s30 = sshll.u32 [#allocation5], 4
      %s31 = int_to_ptr.vmem [resolvable:$true] %s30
      %36 = dma.hbm_to_vmem [thread:$0]  %s1, 512, %s31, [#allocation6], 128, 128, 8
    $region9: #{tpu_custom_call.1} parent=1 // pred_fallthru
      _
    // Predicated region
    $region10: #{tpu_custom_call.1} parent=1 // pred_check
      _
    $region11: #{tpu_custom_call.1} parent=1 // pred_check_branch
      %38 = sbr.rel (0) target = $region13
    $region12: #{tpu_custom_call.1} parent=1 // pred_region
      _
    $region13: #{tpu_custom_call.1} parent=1 // pred_fallthru
      _
    // Predicated region
    $region14: #{tpu_custom_call.1} parent=1 // pred_check
      _
    $region15: #{tpu_custom_call.1} parent=1 // pred_check_branch
      %40 = sbr.rel (0) target = $region17
    $region16: #{tpu_custom_call.1} parent=1 // pred_region
      %s42 = ssub.s32 2048, 2048
      %43 = vsyncadd [#allocation6], %s42
      %s44 = sshll.u32 [#allocation7], 4
      %s45 = int_to_ptr.vmem [resolvable:$true] %s44
      %50 = dma.hbm_to_vmem [thread:$0]  %s3, 2048, %s45, [#allocation6], 128, 128, 8
    $region17: #{tpu_custom_call.1} parent=1 // pred_fallthru
      _
    // Predicated region
    $region18: #{tpu_custom_call.1} parent=1 // pred_check
      _
    $region19: #{tpu_custom_call.1} parent=1 // pred_check_branch
      %52 = sbr.rel (0) target = $region21
    $region20: #{tpu_custom_call.1} parent=1 // pred_region
      _
    $region21: #{tpu_custom_call.1} parent=1 // pred_fallthru
      _
    // Predicated region
    $region22: #{tpu_custom_call.1} parent=1 // pred_check
      _
    $region23: #{tpu_custom_call.1} parent=1 // pred_check_branch
      %54 = sbr.rel (0) target = $region25
    $region24: #{tpu_custom_call.1} parent=1 // pred_region
      %55 = dma.done [#allocation3], 256
    $region25: #{tpu_custom_call.1} parent=1 // pred_fallthru
      _
    // Predicated region
    $region26: #{tpu_custom_call.1} parent=1 // pred_check
      _
    $region27: #{tpu_custom_call.1} parent=1 // pred_check_branch
      %57 = sbr.rel (0) target = $region29
    $region28: #{tpu_custom_call.1} parent=1 // pred_region
      %58 = dma.done [#allocation6], 512
    $region29: #{tpu_custom_call.1} parent=1 // pred_fallthru
      _
    // Predicated region
    $region30: #{tpu_custom_call.1} parent=1 // pred_check
      _
    $region31: #{tpu_custom_call.1} parent=1 // pred_check_branch
      %60 = sbr.rel (0) target = $region33
    $region32: #{tpu_custom_call.1} parent=1 // pred_region
      %61 = dma.done [#allocation6], 2048
    $region33: #{tpu_custom_call.1} parent=1 // pred_fallthru
      _
    %v62 = vld [vmem:[#allocation2] sm:$0xff]
    %v63 = vld [vmem:[#allocation2 + $0x8] sm:$0xff]
    %v64 = vld [vmem:[#allocation5] sm:$0xff]
    %v65 = vld [vmem:[#allocation5 + $0x8] sm:$0xff]
    %v66 = vld [vmem:[#allocation5 + $0x10] sm:$0xff]
    %v67 = vld [vmem:[#allocation5 + $0x18] sm:$0xff]
    %v68 = vld [vmem:[%s2] sm:$0x1]
    %v70 = vlaneseq
    %v71 = vshrl.u32 %v70, 7
    %v72 = vsub.s32 0, %v71
    %v73 = vrot.slane %v68, %v72
    %vm75 = vcmask 261120
    %v77 = vsel %vm75, %v62, 0
    %v80 = vsel %vm75, %v63, 0
    %82 = vmatprep.subr.mxu0 0.0
    %83 = vmatpush1.msra.mxu0 %v64
    %84 = vmatprep.subr.mxu0 0.0
    %85 = vmatpush1.msra.mxu0 %v65
    %86 = vmatprep.subr.mxu0 0.0
    %87 = vmatpush1.msra.mxu0 %v66
    %88 = vmatprep.subr.mxu0 0.0
    %89 = vmatpush1.msra.mxu0 %v67
    %90 = vmatprep.subr.mxu0 0.0
    %91 = vmatpush1.msra.mxu0 0.0
    %92 = vmatprep.subr.mxu0 0.0
    %93 = vmatpush1.msra.mxu0 0.0
    %94 = vmatprep.subr.mxu0 0.0
    %95 = vmatpush1.msra.mxu0 0.0
    %96 = vmatprep.subr.mxu0 0.0
    %97 = vmatpush1.msra.mxu0 0.0
    %98 = vmatprep.subr.mxu0 0.0
    %99 = vmatpush1.msra.mxu0 0.0
    %100 = vmatprep.subr.mxu0 0.0
    %101 = vmatpush1.msra.mxu0 0.0
    %102 = vmatprep.subr.mxu0 0.0
    %103 = vmatpush1.msra.mxu0 0.0
    %104 = vmatprep.subr.mxu0 0.0
    %105 = vmatpush1.msra.mxu0 0.0
    %106 = vmatprep.subr.mxu0 0.0
    %107 = vmatpush1.msra.mxu0 0.0
    %108 = vmatprep.subr.mxu0 0.0
    %109 = vmatpush1.msra.mxu0 0.0
    %110 = vmatprep.subr.mxu0 0.0
    %111 = vmatpush1.msra.mxu0 0.0
    %112 = vmatprep.subr.mxu0 0.0
    %113 = vmatpush1.msra.mxu0 0.0
    %114 = vmatprep.subr.mxu0 0.0
    %115 = vmatpush1.msra.mxu0 0.0
    %116 = vmatprep.subr.mxu0 0.0
    %117 = vmatpush1.msra.mxu0 0.0
    %118 = vmatprep.subr.mxu0 0.0
    %119 = vmatpush1.msra.mxu0 0.0
    %120 = vmatprep.subr.mxu0 0.0
    %121 = vmatpush1.msra.mxu0 0.0
    %122 = vmatprep.subr.mxu0 0.0
    %123 = vmatpush1.msra.mxu0 0.0
    %124 = vmatprep.subr.mxu0 0.0
    %125 = vmatpush1.msra.mxu0 0.0
    %126 = vmatprep.subr.mxu0 0.0
    %127 = vmatpush1.msra.mxu0 0.0
    %128 = vmatprep.subr.mxu0 0.0
    %129 = vmatpush1.msra.mxu0 0.0
    %130 = vmatprep.subr.mxu0 0.0
    %131 = vmatpush1.msra.mxu0 0.0
    %132 = vmatprep.subr.mxu0 0.0
    %133 = vmatpush1.msra.mxu0 0.0
    %134 = vmatprep.subr.mxu0 0.0
    %135 = vmatpush1.msra.mxu0 0.0
    %136 = vmatprep.subr.mxu0 0.0
    %137 = vmatpush1.msra.mxu0 0.0
    %138 = vmatprep.subr.mxu0 0.0
    %139 = vmatpush1.msra.mxu0 0.0
    %140 = vmatprep.subr.mxu0 0.0
    %141 = vmatpush1.msra.mxu0 0.0
    %142 = vmatprep.subr.mxu0 0.0
    %143 = vmatpush1.msra.mxu0 0.0
    %144 = vmatprep.subr.mxu0 0.0
    %145 = vmatpush1.msra.mxu0 0.0
    %146 = vmatprep.mubr.f32.mxu0 0.0
    %147 = vmatmul.mubr.f32.gmra.mrb[0].mxu0 %v77
    %v148 = vpop.f32.mrb[0].mxu0
    %v149 = vadd.f32 %v73, %v148
    %v150 = vpop.f32.mrb[0].mxu0
    %151 = vmatprep.mubr.f32.mxu0 0.0
    %152 = vmatmul.mubr.f32.gmra.mrb[0].mxu0 %v80
    %v153 = vpop.f32.mrb[0].mxu0
    %v154 = vadd.f32 %v73, %v153
    %v155 = vpop.f32.mrb[0].mxu0
    %156 = vdwg.mxu0
    %v157 = vmax.f32 %v149, 0.0
    %v158 = vmax.f32 %v154, 0.0
    %v159 = vld [vmem:[#allocation7] sm:$0xff]
    %v160 = vld [vmem:[#allocation7 + $0x8] sm:$0xff]
    %v161 = vld [vmem:[#allocation7 + $0x10] sm:$0xff]
    %v162 = vld [vmem:[#allocation7 + $0x18] sm:$0xff]
    %v163 = vld [vmem:[#allocation7 + $0x20] sm:$0xff]
    %v164 = vld [vmem:[#allocation7 + $0x28] sm:$0xff]
    %v165 = vld [vmem:[#allocation7 + $0x30] sm:$0xff]
    %v166 = vld [vmem:[#allocation7 + $0x38] sm:$0xff]
    %v167 = vld [vmem:[#allocation7 + $0x40] sm:$0xff]
    %v168 = vld [vmem:[#allocation7 + $0x48] sm:$0xff]
    %v169 = vld [vmem:[#allocation7 + $0x50] sm:$0xff]
    %v170 = vld [vmem:[#allocation7 + $0x58] sm:$0xff]
    %v171 = vld [vmem:[#allocation7 + $0x60] sm:$0xff]
    %v172 = vld [vmem:[#allocation7 + $0x68] sm:$0xff]
    %v173 = vld [vmem:[#allocation7 + $0x70] sm:$0xff]
    %v174 = vld [vmem:[#allocation7 + $0x78] sm:$0xff]
    %v175 = vld [vmem:[%s4] sm:$0x1]
    %v177 = vlaneseq
    %v178 = vshrl.u32 %v177, 7
    %v179 = vsub.s32 0, %v178
    %v180 = vrot.slane %v175, %v179
    %182 = vmatprep.subr.mxu0 0.0
    %183 = vmatpush1.msra.mxu0 %v159
    %184 = vmatprep.subr.mxu0 0.0
    %185 = vmatpush1.msra.mxu0 %v160
    %186 = vmatprep.subr.mxu0 0.0
    %187 = vmatpush1.msra.mxu0 %v161
    %188 = vmatprep.subr.mxu0 0.0
    %189 = vmatpush1.msra.mxu0 %v162
    %190 = vmatprep.subr.mxu0 0.0
    %191 = vmatpush1.msra.mxu0 %v163
    %192 = vmatprep.subr.mxu0 0.0
    %193 = vmatpush1.msra.mxu0 %v164
    %194 = vmatprep.subr.mxu0 0.0
    %195 = vmatpush1.msra.mxu0 %v165
    %196 = vmatprep.subr.mxu0 0.0
    %197 = vmatpush1.msra.mxu0 %v166
    %198 = vmatprep.subr.mxu0 0.0
    %199 = vmatpush1.msra.mxu0 %v167
    %200 = vmatprep.subr.mxu0 0.0
    %201 = vmatpush1.msra.mxu0 %v168
    %202 = vmatprep.subr.mxu0 0.0
    %203 = vmatpush1.msra.mxu0 %v169
    %204 = vmatprep.subr.mxu0 0.0
    %205 = vmatpush1.msra.mxu0 %v170
    %206 = vmatprep.subr.mxu0 0.0
    %207 = vmatpush1.msra.mxu0 %v171
    %208 = vmatprep.subr.mxu0 0.0
    %209 = vmatpush1.msra.mxu0 %v172
    %210 = vmatprep.subr.mxu0 0.0
    %211 = vmatpush1.msra.mxu0 %v173
    %212 = vmatprep.subr.mxu0 0.0
    %213 = vmatpush1.msra.mxu0 %v174
    %214 = vmatprep.subr.mxu0 0.0
    %215 = vmatpush1.msra.mxu0 0.0
    %216 = vmatprep.subr.mxu0 0.0
    %217 = vmatpush1.msra.mxu0 0.0
    %218 = vmatprep.subr.mxu0 0.0
    %219 = vmatpush1.msra.mxu0 0.0
    %220 = vmatprep.subr.mxu0 0.0
    %221 = vmatpush1.msra.mxu0 0.0
    %222 = vmatprep.subr.mxu0 0.0
    %223 = vmatpush1.msra.mxu0 0.0
    %224 = vmatprep.subr.mxu0 0.0
    %225 = vmatpush1.msra.mxu0 0.0
    %226 = vmatprep.subr.mxu0 0.0
    %227 = vmatpush1.msra.mxu0 0.0
    %228 = vmatprep.subr.mxu0 0.0
    %229 = vmatpush1.msra.mxu0 0.0
    %230 = vmatprep.subr.mxu0 0.0
    %231 = vmatpush1.msra.mxu0 0.0
    %232 = vmatprep.subr.mxu0 0.0
    %233 = vmatpush1.msra.mxu0 0.0
    %234 = vmatprep.subr.mxu0 0.0
    %235 = vmatpush1.msra.mxu0 0.0
    %236 = vmatprep.subr.mxu0 0.0
    %237 = vmatpush1.msra.mxu0 0.0
    %238 = vmatprep.subr.mxu0 0.0
    %239 = vmatpush1.msra.mxu0 0.0
    %240 = vmatprep.subr.mxu0 0.0
    %241 = vmatpush1.msra.mxu0 0.0
    %242 = vmatprep.subr.mxu0 0.0
    %243 = vmatpush1.msra.mxu0 0.0
    %244 = vmatprep.subr.mxu0 0.0
    %245 = vmatpush1.msra.mxu0 0.0
    %246 = vmatprep.mubr.f32.mxu0 0.0
    %247 = vmatmul.mubr.f32.gmra.mrb[0].mxu0 %v157
    %v248 = vpop.f32.mrb[0].mxu0
    %v249 = vadd.f32 %v180, %v248
    %v250 = vpop.f32.mrb[0].mxu0
    %251 = vmatprep.mubr.f32.mxu0 0.0
    %252 = vmatmul.mubr.f32.gmra.mrb[0].mxu0 %v158
    %v253 = vpop.f32.mrb[0].mxu0
    %v254 = vadd.f32 %v180, %v253
    %v255 = vpop.f32.mrb[0].mxu0
    %256 = vdwg.mxu0
    %257 = vst [vmem:[#allocation8] sm:$0xff] %v249
    %258 = vst [vmem:[#allocation8 + $0x8] sm:$0xff] %v254
    // Predicated region
    $region34: #{tpu_custom_call.1} parent=1 // pred_check
      _
    $region35: #{tpu_custom_call.1} parent=1 // pred_check_branch
      %260 = sbr.rel (0) target = $region37
    $region36: #{tpu_custom_call.1} parent=1 // pred_region
      %s262 = ssub.s32 256, 256
      %263 = vsyncadd [#allocation4], %s262
      %s264 = sshll.u32 [#allocation8], 4
      %s265 = int_to_ptr.vmem [resolvable:$true] %s264
      %270 = dma.vmem_to_hbm [thread:$0]  %s265, 256, %s5, [#allocation4], 128, 128, 8
    $region37: #{tpu_custom_call.1} parent=1 // pred_fallthru
      _
    // Predicated region
    $region38: #{tpu_custom_call.1} parent=1 // pred_check
      _
    $region39: #{tpu_custom_call.1} parent=1 // pred_check_branch
      %272 = sbr.rel (0) target = $region41
    $region40: #{tpu_custom_call.1} parent=1 // pred_region
      %273 = dma.done [#allocation4], 256
    $region41: #{tpu_custom_call.1} parent=1 // pred_fallthru
      _
    %274 = vsyncpa [#allocation3], 1
    %275 = vsyncpa [#allocation6], 1
    %276 = vsyncpa [#allocation4], 1

</llo_original>
